<compile_context>
chip_gen: v7x
topology: tpu7x:2x2x1
jax: 0.10.0
libtpu: 0.0.40
codegen_flags: <defaults>
</compile_context>

<pallas_src>
import functools

import jax
import jax.numpy as jnp
import numpy as np
from jax.experimental import pallas as pl
from jax.experimental.pallas import tpu as pltpu

N_EMBED = 30
HEAD_SIZE = 10
BLOCK_SIZE = 256  # from the PyTorch module; T <= block_size
LANE = 128        # TPU lane width; Q/K/V sections of the packed weight are padded to this


def _head_kernel(x_ref, wqkv_ref, bias_ref, o_ref, *, lane):
    # x_ref:    (T, C)        one batch element (batch dim squeezed by BlockSpec)
    # wqkv_ref: (C, 3*lane)   [Wq^T*sqrt(C) | 0-pad | Wk^T | 0-pad | Wv^T | 0-pad]
    # bias_ref: (T, T)        additive causal bias: 0 where key<=query else -1e30
    # o_ref:    (T, lane)     lane-dense padded output (cols hs: are zero)
    x = x_ref[...]

    # Fused QKV projection, f32 accumulate. Tiny GEMM (K=C=30); keep f32 for accuracy.
    qkv = jnp.dot(x, wqkv_ref[...], preferred_element_type=jnp.float32)  # (T, 3*lane)

    # Lane-tile-aligned slices -> free views (no lane shuffles).
    q = qkv[:, :lane]             # sqrt(C) score scale already folded into these columns
    k = qkv[:, lane:2 * lane]
    v = qkv[:, 2 * lane:]

    # Scores: q @ k^T, contracting over the padded 128-wide axis (pad columns are zero).
    # bf16 operands -> native MXU path on v6e/v7x; f32 accumulation.
    s = jax.lax.dot_general(
        q.astype(jnp.bfloat16), k.astype(jnp.bfloat16),
        (((1,), (1,)), ((), ())),
        preferred_element_type=jnp.float32,
    )  # (T, T)

    # Causal mask: single add of the precomputed bias (diagonal kept -> row max finite).
    s = s + bias_ref[...]

    # Numerically stable softmax in f32; reciprocal on the EUP.
    m = jnp.max(s, axis=-1, keepdims=True)
    e = jnp.exp(s - m)
    denom = jnp.sum(e, axis=-1, keepdims=True)
    p = e * pl.reciprocal(denom, approx=True)

    # Output matmul, bf16 operands / f32 accumulate; lane-dense (T, 128) store.
    o_ref[...] = jnp.dot(
        p.astype(jnp.bfloat16), v.astype(jnp.bfloat16),
        preferred_element_type=jnp.float32,
    ).astype(o_ref.dtype)


@jax.jit
def head_attention(x, w_query, w_key, w_value):
    """x: (B, T, C) f32. w_query/w_key/w_value: (head_size, C) nn.Linear weights (bias=False)."""
    B, T, C = x.shape
    hs = w_query.shape[0]

    # Host-side packing: pre-transpose, pad each section to a 128-lane boundary, fold the
    # score scale (the source multiplies scores by C**0.5) into the Q columns.
    scale = jnp.float32(float(C) ** 0.5)
    wqkv = jnp.zeros((C, 3 * LANE), jnp.float32)
    wqkv = wqkv.at[:, 0:hs].set(w_query.T * scale)
    wqkv = wqkv.at[:, LANE:LANE + hs].set(w_key.T)
    wqkv = wqkv.at[:, 2 * LANE:2 * LANE + hs].set(w_value.T)

    # Precomputed additive causal bias (T, T): 0 on/below the diagonal, -1e30 above.
    rows = jnp.arange(T)[:, None]
    cols = jnp.arange(T)[None, :]
    bias = jnp.where(cols <= rows, 0.0, -1e30).astype(jnp.float32)

    out_padded = pl.pallas_call(
        functools.partial(_head_kernel, lane=LANE),
        out_shape=jax.ShapeDtypeStruct((B, T, LANE), jnp.float32),
        grid_spec=pltpu.PrefetchScalarGridSpec(
            num_scalar_prefetch=0,
            grid=(B,),
            in_specs=[
                pl.BlockSpec((None, T, C), lambda b: (b, 0, 0)),      # per-batch x tile
                pl.BlockSpec((C, 3 * LANE), lambda b: (0, 0)),        # weights, constant block
                pl.BlockSpec((T, T), lambda b: (0, 0)),               # causal bias, constant block
            ],
            out_specs=pl.BlockSpec((None, T, LANE), lambda b: (b, 0, 0)),
        ),
        # Batch axis is embarrassingly parallel -> shard grid steps across v7x's 2 cores.
        compiler_params=pltpu.CompilerParams(
            dimension_semantics=("parallel",),
        ),
    )(x, wqkv, bias)

    return out_padded[:, :, :hs]


def _reference(x, w_query, w_key, w_value):
    """Pure-JAX reference mirroring the PyTorch forward (eval mode)."""
    B, T, C = x.shape
    q = x @ w_query.T
    k = x @ w_key.T
    v = x @ w_value.T
    wei = (q @ jnp.swapaxes(k, -2, -1)) * (C ** 0.5)
    tril = jnp.tril(jnp.ones((T, T), dtype=bool))
    wei = jnp.where(tril[None, :, :], wei, -jnp.inf)
    wei = jax.nn.softmax(wei, axis=-1)
    return wei @ v


if __name__ == "__main__":
    key = jax.random.PRNGKey(0)
    B, T = 2, 8  # T <= block_size (256)
    kx, kq, kk, kv = jax.random.split(key, 4)

    x = jax.random.normal(kx, (B, T, N_EMBED), dtype=jnp.float32)

    # Deterministic parameter init (uniform, roughly matching nn.Linear's fan-in scaling)
    lim = N_EMBED ** -0.5
    w_query = jax.random.uniform(kq, (HEAD_SIZE, N_EMBED), jnp.float32, -lim, lim)
    w_key = jax.random.uniform(kk, (HEAD_SIZE, N_EMBED), jnp.float32, -lim, lim)
    w_value = jax.random.uniform(kv, (HEAD_SIZE, N_EMBED), jnp.float32, -lim, lim)

    out = head_attention(x, w_query, w_key, w_value)
    out = jax.block_until_ready(out)

    ref = _reference(x, w_query, w_key, w_value)
    # Tolerance accounts for bf16 MXU operands in the two attention matmuls and the EUP
    # approximate reciprocal in the softmax normalization (all accumulation in f32).
    np.testing.assert_allclose(np.asarray(out), np.asarray(ref), rtol=2e-2, atol=2e-2)

    print("KERNEL_OK")
</pallas_src>

<mosaic_0001>
module attributes {stable_mosaic.version = 11 : i64} {
  func.func @_head_kernel(%arg0: i32, %arg1: memref<1x8x30xf32, #tpu.memory_space<vmem>>, %arg2: memref<30x384xf32, #tpu.memory_space<vmem>>, %arg3: memref<8x8xf32, #tpu.memory_space<vmem>>, %arg4: memref<1x8x128xf32, #tpu.memory_space<vmem>>) attributes {dimension_semantics = [#tpu.dimension_semantics<parallel>], iteration_bounds = array<i64: 2>, scalar_prefetch = 0 : i64, scratch_operands = 0 : i64, tpu.core_type = #tpu.core_type<tc>, window_params = [{transform_indices = @transform_0, window_bounds = array<i64: 1, 8, 30>}, {pipeline_mode = #tpu.pipeline_mode<synchronous>, transform_indices = @transform_1, window_bounds = array<i64: 30, 384>}, {pipeline_mode = #tpu.pipeline_mode<synchronous>, transform_indices = @transform_2, window_bounds = array<i64: 8, 8>}, {transform_indices = @transform_3, window_bounds = array<i64: 1, 8, 128>}]} {
    %c0 = arith.constant 0 : index
    %c0_0 = arith.constant 0 : index
    %c0_1 = arith.constant 0 : index
    %0 = vector.load %arg1[%c0, %c0_0, %c0_1] : memref<1x8x30xf32, #tpu.memory_space<vmem>>, vector<1x8x30xf32>
    %1 = vector.shape_cast %0 : vector<1x8x30xf32> to vector<8x30xf32>
    %c0_2 = arith.constant 0 : index
    %c0_3 = arith.constant 0 : index
    %2 = vector.load %arg2[%c0_2, %c0_3] : memref<30x384xf32, #tpu.memory_space<vmem>>, vector<30x384xf32>
    %cst = arith.constant dense<0.000000e+00> : vector<8x384xf32>
    %3 = tpu.matmul %1, %2, %cst {dimension_numbers = #tpu.dot_dimension_numbers<[1], [0], [0], [1], [0, 0, 1, 1], [], []>} : vector<8x30xf32>, vector<30x384xf32>, vector<8x384xf32> -> vector<8x384xf32>
    %4 = vector.extract_strided_slice %3 {offsets = [0, 0], sizes = [8, 128], strides = [1, 1]} : vector<8x384xf32> to vector<8x128xf32>
    %5 = vector.extract_strided_slice %3 {offsets = [0, 128], sizes = [8, 128], strides = [1, 1]} : vector<8x384xf32> to vector<8x128xf32>
    %6 = vector.extract_strided_slice %3 {offsets = [0, 256], sizes = [8, 128], strides = [1, 1]} : vector<8x384xf32> to vector<8x128xf32>
    %7 = arith.truncf %4 : vector<8x128xf32> to vector<8x128xbf16>
    %8 = arith.truncf %5 : vector<8x128xf32> to vector<8x128xbf16>
    %cst_4 = arith.constant dense<0.000000e+00> : vector<8x8xf32>
    %9 = tpu.matmul %7, %8, %cst_4 {dimension_numbers = #tpu.dot_dimension_numbers<[1], [1], [0], [0], [0, 0, 1, 0], [], []>} : vector<8x128xbf16>, vector<8x128xbf16>, vector<8x8xf32> -> vector<8x8xf32>
    %c0_5 = arith.constant 0 : index
    %c0_6 = arith.constant 0 : index
    %10 = vector.load %arg3[%c0_5, %c0_6] : memref<8x8xf32, #tpu.memory_space<vmem>>, vector<8x8xf32>
    %11 = arith.addf %9, %10 : vector<8x8xf32>
    %cst_7 = arith.constant dense<0xFF800000> : vector<8xf32>
    %12 = vector.multi_reduction <maximumf>, %11, %cst_7 [1] : vector<8x8xf32> to vector<8xf32>
    %13 = vector.shape_cast %12 : vector<8xf32> to vector<8x1xf32>
    %14 = vector.broadcast %13 : vector<8x1xf32> to vector<8x8xf32>
    %15 = arith.subf %11, %14 : vector<8x8xf32>
    %16 = math.exp %15 : vector<8x8xf32>
    %cst_8 = arith.constant dense<0.000000e+00> : vector<8xf32>
    %17 = vector.multi_reduction <add>, %16, %cst_8 [1] : vector<8x8xf32> to vector<8xf32>
    %18 = vector.shape_cast %17 : vector<8xf32> to vector<8x1xf32>
    %19 = tpu.reciprocal %18 {approx = true} : vector<8x1xf32> -> vector<8x1xf32>
    %20 = vector.broadcast %19 : vector<8x1xf32> to vector<8x8xf32>
    %21 = arith.mulf %16, %20 : vector<8x8xf32>
    %22 = arith.truncf %21 : vector<8x8xf32> to vector<8x8xbf16>
    %23 = arith.truncf %6 : vector<8x128xf32> to vector<8x128xbf16>
    %cst_9 = arith.constant dense<0.000000e+00> : vector<8x128xf32>
    %24 = tpu.matmul %22, %23, %cst_9 {dimension_numbers = #tpu.dot_dimension_numbers<[1], [0], [0], [1], [0, 0, 1, 1], [], []>} : vector<8x8xbf16>, vector<8x128xbf16>, vector<8x128xf32> -> vector<8x128xf32>
    %c0_10 = arith.constant 0 : index
    %c0_11 = arith.constant 0 : index
    %c0_12 = arith.constant 0 : index
    %25 = vector.load %arg4[%c0_10, %c0_11, %c0_12] : memref<1x8x128xf32, #tpu.memory_space<vmem>>, vector<1x8x128xf32>
    %26 = vector.shape_cast %25 : vector<1x8x128xf32> to vector<8x128xf32>
    %27 = vector.shape_cast %24 : vector<8x128xf32> to vector<1x8x128xf32>
    tpu.vector_store %arg4[%c0_10, %c0_11, %c0_12], %27 {strides = array<i32>} : memref<1x8x128xf32, #tpu.memory_space<vmem>>, vector<1x8x128xf32>,
    return
  }
  func.func @transform_0(%arg0: i32) -> (i32, i32, i32) {
    %c0_i32 = arith.constant 0 : i32
    %c0_i32_0 = arith.constant 0 : i32
    %c0_i32_1 = arith.constant 0 : i32
    return %arg0, %c0_i32, %c0_i32_0 : i32, i32, i32
  }
  func.func @transform_1(%arg0: i32) -> (i32, i32) {
    %c0_i32 = arith.constant 0 : i32
    %c0_i32_0 = arith.constant 0 : i32
    %c0_i32_1 = arith.constant 0 : i32
    return %c0_i32, %c0_i32_0 : i32, i32
  }
  func.func @transform_2(%arg0: i32) -> (i32, i32) {
    %c0_i32 = arith.constant 0 : i32
    %c0_i32_0 = arith.constant 0 : i32
    %c0_i32_1 = arith.constant 0 : i32
    return %c0_i32, %c0_i32_0 : i32, i32
  }
  func.func @transform_3(%arg0: i32) -> (i32, i32, i32) {
    %c0_i32 = arith.constant 0 : i32
    %c0_i32_0 = arith.constant 0 : i32
    %c0_i32_1 = arith.constant 0 : i32
    return %arg0, %c0_i32, %c0_i32_0 : i32, i32, i32
  }
}

</mosaic_0001>

<llo_original>
// kernel: head_attention.1
$region0: #{head_attention.1}
  #allocation0 [shape = 'u32[]', space=smem, size = 0x4, offset = 0x4, fixed_abs, tag = 'smem constant byte address 0x4 - core index']
  #allocation1 [shape = 'u32[144,128]{1,0:T(1,128)}', space=vmem, size = 0x12000, scoped, tag = 'internal scratch']
  %s0 = inlined_call_operand.vmem [shape: f32[2,8,30], index: 0, kind: input, shape index: {}]
  %s1 = inlined_call_operand.vmem [shape: f32[30,384], index: 1, kind: input, shape index: {}]
  %s2 = inlined_call_operand.vmem [shape: f32[8,8], index: 2, kind: input, shape index: {}]
  %s3 = inlined_call_operand.hbm [shape: f32[2,8,128], index: 3, kind: output, shape index: {}]
  %s4 = sld [smem:[#allocation0]]
  $region45: #{head_attention.1} parent=0
    _
  %s6 = ssub.s32 1, %s4
  %s7 = scalar_select 0, %s6, %s4
  $region1: #{head_attention.1} parent=0
    #allocation2 [shape = 'u8[8192]{0}', space=vmem, size = 0x2000, scoped, tag = 'output window, operand 0']
    #allocation3 [shape = 's32[2]{0}', space=sflag, size = 0x8, scoped, tag = 'scoped memory for head_attention.1']
    %8 = vsyncpa [#allocation3], 0
    %s9 = scalar_lea.sflag [#allocation3], 1
    %10 = vsyncpa %s9, 0
    loop: start=0, step=1, limit=4
    $region2: #{head_attention.1} parent=1 // loop_pre_header
      _
    $region3: #{head_attention.1} parent=1 // loop_header
      %s12 = sphi 0, %s16
      %p13 = scmp.ge.s32.totalorder %s12, 4
      %s22 = sphi 0, %s24
      %s25 = sphi 0, %s22
      %s26 = sphi 0, %s25
      %s42 = sphi 0, %s26
      %s46 = sphi 0, %s46
      %s48 = sphi 0, %s46
      %s49 = sphi 0, %s48
      %s63 = sphi 0, %s49
      %s67 = sphi 0, %s67
      %s69 = sphi 0, %s67
      %s70 = sphi 0, %s69
      %s84 = sphi 0, %s70
      %s90 = sphi 0, %s92
      %s93 = sphi 0, %s90
      %s94 = sphi 0, %s93
      %s110 = sphi 0, %s94
    $region4: #{head_attention.1} parent=1 // loop_header_branch
      %15 = sbr.rel (%p13) target = $region8
    $region5: #{head_attention.1} parent=1 // loop_body
      %s17 = ssub.s32 %s12, 1
      %s18 = ssub.s32 %s12, 2
      %s19 = sadd.s32 %s12, 1
      %s20 = ssub.s32 %s12, %s19
      %p21 = scmp.eq.s32.totalorder %s20, 0
      %s23 = sadd.s32 %s22, 1
      %s24 = scalar_select %p21, %s22, %s23
      %p27 = pneg %p21
      %p28 = scmp.eq.s32.totalorder %s12, 1
      %p29 = por %p27, %p28
      %p30 = scmp.ne.s32.totalorder %s22, %s25
      %p31 = scmp.eq.s32.totalorder %s12, 0
      %p32 = por %p30, %p31
      %p33 = scmp.ne.s32.totalorder %s22, %s25
      %p34 = scmp.eq.s32.totalorder %s17, 1
      %p35 = por %p33, %p34
      %p36 = scmp.ne.s32.totalorder %s25, %s26
      %p37 = scmp.eq.s32.totalorder %s17, 0
      %p38 = por %p36, %p37
      %p39 = scmp.ne.s32.totalorder %s25, %s26
      %p40 = scmp.eq.s32.totalorder %s18, 1
      %p41 = por %p39, %p40
      %p43 = scmp.ne.s32.totalorder %s26, %s42
      %p44 = scmp.eq.s32.totalorder %s18, 0
      %p45 = por %p43, %p44
      %s47 = sadd.s32 %s46, 1
      %p50 = scmp.eq.s32.totalorder %s12, 1
      %p51 = scmp.ne.s32.totalorder %s46, %s48
      %p52 = scmp.eq.s32.totalorder %s12, 0
      %p53 = por %p51, %p52
      %p54 = scmp.ne.s32.totalorder %s46, %s48
      %p55 = scmp.eq.s32.totalorder %s17, 1
      %p56 = por %p54, %p55
      %p57 = scmp.ne.s32.totalorder %s48, %s49
      %p58 = scmp.eq.s32.totalorder %s17, 0
      %p59 = por %p57, %p58
      %p60 = scmp.ne.s32.totalorder %s48, %s49
      %p61 = scmp.eq.s32.totalorder %s18, 1
      %p62 = por %p60, %p61
      %p64 = scmp.ne.s32.totalorder %s49, %s63
      %p65 = scmp.eq.s32.totalorder %s18, 0
      %p66 = por %p64, %p65
      %s68 = sadd.s32 %s67, 1
      %p71 = scmp.eq.s32.totalorder %s12, 1
      %p72 = scmp.ne.s32.totalorder %s67, %s69
      %p73 = scmp.eq.s32.totalorder %s12, 0
      %p74 = por %p72, %p73
      %p75 = scmp.ne.s32.totalorder %s67, %s69
      %p76 = scmp.eq.s32.totalorder %s17, 1
      %p77 = por %p75, %p76
      %p78 = scmp.ne.s32.totalorder %s69, %s70
      %p79 = scmp.eq.s32.totalorder %s17, 0
      %p80 = por %p78, %p79
      %p81 = scmp.ne.s32.totalorder %s69, %s70
      %p82 = scmp.eq.s32.totalorder %s18, 1
      %p83 = por %p81, %p82
      %p85 = scmp.ne.s32.totalorder %s70, %s84
      %p86 = scmp.eq.s32.totalorder %s18, 0
      %p87 = por %p85, %p86
      %s88 = ssub.s32 %s12, %s19
      %p89 = scmp.eq.s32.totalorder %s88, 0
      %s91 = sadd.s32 %s90, 1
      %s92 = scalar_select %p89, %s90, %s91
      %p95 = pneg %p89
      %p96 = scmp.eq.s32.totalorder %s12, 1
      %p97 = por %p95, %p96
      %p98 = scmp.ne.s32.totalorder %s90, %s93
      %p99 = scmp.eq.s32.totalorder %s12, 0
      %p100 = por %p98, %p99
      %p101 = scmp.ne.s32.totalorder %s90, %s93
      %p102 = scmp.eq.s32.totalorder %s17, 1
      %p103 = por %p101, %p102
      %p104 = scmp.ne.s32.totalorder %s93, %s94
      %p105 = scmp.eq.s32.totalorder %s17, 0
      %p106 = por %p104, %p105
      %p107 = scmp.ne.s32.totalorder %s93, %s94
      %p108 = scmp.eq.s32.totalorder %s18, 1
      %p109 = por %p107, %p108
      %p111 = scmp.ne.s32.totalorder %s94, %s110
      %p112 = scmp.eq.s32.totalorder %s18, 0
      %p113 = por %p111, %p112
      %p114 = scmp.le.s32.totalorder 1, %s12
      %p115 = scmp.lt.s32.totalorder %s12, 3
      %p116 = pnand %p114, %p115
      %p117 = pneg %p116
      // Predicated region
      $region9: #{head_attention.1} parent=5 // pred_check
        _
      $region10: #{head_attention.1} parent=5 // pred_check_branch
        %119 = sbr.rel (%p116) target = $region12
      $region11: #{head_attention.1} parent=5 // pred_region
        %s120 = ssub.s32 %s12, 1
        // Predicated region
        $region13: #{head_attention.1} parent=11 // pred_check
          %p121 = pneg %p59
        $region14: #{head_attention.1} parent=11 // pred_check_branch
          %123 = sbr.rel (%p121) target = $region16
        $region15: #{head_attention.1} parent=11 // pred_region
          _
        $region16: #{head_attention.1} parent=11 // pred_fallthru
          _
        // Predicated region
        $region17: #{head_attention.1} parent=11 // pred_check
          %p124 = pneg %p80
        $region18: #{head_attention.1} parent=11 // pred_check_branch
          %126 = sbr.rel (%p124) target = $region20
        $region19: #{head_attention.1} parent=11 // pred_region
          _
        $region20: #{head_attention.1} parent=11 // pred_fallthru
          _
      $region12: #{head_attention.1} parent=5 // pred_fallthru
        _
      %p127 = scmp.lt.s32.totalorder %s12, 2
      // Predicated region
      $region21: #{head_attention.1} parent=5 // pred_check
        %p128 = pneg %p127
      $region22: #{head_attention.1} parent=5 // pred_check_branch
        %130 = sbr.rel (%p128) target = $region24
      $region23: #{head_attention.1} parent=5 // pred_region
        // Predicated region
        $region25: #{head_attention.1} parent=23 // pred_check
          %p131 = pneg %p32
        $region26: #{head_attention.1} parent=23 // pred_check_branch
          %133 = sbr.rel (%p131) target = $region28
        $region27: #{head_attention.1} parent=23 // pred_region
          %p134 = scmp.lt.s32.totalorder %s12, 1
          %s135 = scalar_select %p134, %s12, 1
          %s136 = smul.addr %s135, 8
          %s137 = scalar_lea.vmem %s0, %s136
        $region28: #{head_attention.1} parent=23 // pred_fallthru
          _
      $region24: #{head_attention.1} parent=5 // pred_fallthru
        _
      %p138 = scmp.le.s32.totalorder 1, %s12
      %p139 = scmp.lt.s32.totalorder %s12, 3
      %p140 = pnand %p138, %p139
      %p141 = pneg %p140
      // Predicated region
      $region29: #{head_attention.1} parent=5 // pred_check
        _
      $region30: #{head_attention.1} parent=5 // pred_check_branch
        %143 = sbr.rel (%p140) target = $region32
      $region31: #{head_attention.1} parent=5 // pred_region
        %s144 = ssub.s32 %s12, 1
        %p145 = scmp.lt.s32.totalorder %s17, 1
        %s146 = scalar_select %p145, %s17, 1
        %s147 = smul.addr %s146, 8
        %s148 = scalar_lea.vmem %s0, %s147
        %p149 = pneg %p38
        %p150 = pneg %p35
        %p151 = pneg %p59
        %p152 = pneg %p56
        %p153 = pneg %p80
        %p154 = pneg %p77
        %p155 = pneg %p106
        %p156 = pneg %p103
        %s157 = sand.u32 %s93, 1
        %s158 = scalar_lea.sflag [#allocation3], %s157
        %s159 = sand.u32 %s93, 1
        %s160 = smul.addr %s159, 8
        %s161 = scalar_lea.vmem [#allocation2], %s160
        %p162 = scmp.lt.s32.totalorder %s17, 1
        %s163 = scalar_select %p162, %s17, 1
        %s164 = smul.addr %s163, 8
        %s165 = scalar_lea.vmem %s0, %s164
        %v167 = vld [vmem:[%s165] sm:$0xff]
        %v168 = vld [vmem:[%s1] sm:$0xff]
        %v169 = vld [vmem:[%s1 + $0x8] sm:$0xff]
        %v170 = vld [vmem:[%s1 + $0x10] sm:$0xff]
        %v171 = vld [vmem:[%s1 + $0x18] sm:$0xff]
        %v172 = vld [vmem:[%s1 + $0x20] sm:$0xff]
        %v173 = vld [vmem:[%s1 + $0x28] sm:$0xff]
        %v174 = vld [vmem:[%s1 + $0x30] sm:$0xff]
        %v175 = vld [vmem:[%s1 + $0x38] sm:$0xff]
        %v176 = vld [vmem:[%s1 + $0x40] sm:$0xff]
        %v177 = vld [vmem:[%s1 + $0x48] sm:$0x3f]
        %v178 = vld [vmem:[%s1 + $0x50] sm:$0x3f]
        %v179 = vld [vmem:[%s1 + $0x58] sm:$0x3f]
        %vm180 = vcmask 244736
        %v182 = vsel %vm180, %v167, 0
        %vm184 = vcmask 1045504
        %v186 = vsel %vm184, %v177, 0
        %v189 = vsel %vm184, %v178, 0
        %v192 = vsel %vm184, %v179, 0
        %194 = vmatprep.subr.mxu0 %v169
        %195 = vmatpush1.msra.mxu0 %v168
        %196 = vmatprep.subr.mxu0 %v172
        %197 = vmatpush1.msra.mxu0 %v171
        %198 = vmatprep.subr.mxu0 %v175
        %199 = vmatpush1.msra.mxu0 %v174
        %200 = vmatprep.subr.mxu0 %v189
        %201 = vmatpush1.msra.mxu0 %v186
        %202 = vmatprep.subr.mxu0 0.0
        %203 = vmatpush1.msra.mxu0 0.0
        %204 = vmatprep.subr.mxu0 0.0
        %205 = vmatpush1.msra.mxu0 0.0
        %206 = vmatprep.subr.mxu0 0.0
        %207 = vmatpush1.msra.mxu0 0.0
        %208 = vmatprep.subr.mxu0 0.0
        %209 = vmatpush1.msra.mxu0 0.0
        %210 = vmatprep.subr.mxu0 0.0
        %211 = vmatpush1.msra.mxu0 0.0
        %212 = vmatprep.subr.mxu0 0.0
        %213 = vmatpush1.msra.mxu0 0.0
        %214 = vmatprep.subr.mxu0 0.0
        %215 = vmatpush1.msra.mxu0 0.0
        %216 = vmatprep.subr.mxu0 0.0
        %217 = vmatpush1.msra.mxu0 0.0
        %218 = vmatprep.subr.mxu0 0.0
        %219 = vmatpush1.msra.mxu0 0.0
        %220 = vmatprep.subr.mxu0 0.0
        %221 = vmatpush1.msra.mxu0 0.0
        %222 = vmatprep.subr.mxu0 0.0
        %223 = vmatpush1.msra.mxu0 0.0
        %224 = vmatprep.subr.mxu0 0.0
        %225 = vmatpush1.msra.mxu0 0.0
        %226 = vmatprep.subr.mxu0 0.0
        %227 = vmatpush1.msra.mxu0 0.0
        %228 = vmatprep.subr.mxu0 0.0
        %229 = vmatpush1.msra.mxu0 0.0
        %230 = vmatprep.subr.mxu0 0.0
        %231 = vmatpush1.msra.mxu0 0.0
        %232 = vmatprep.subr.mxu0 0.0
        %233 = vmatpush1.msra.mxu0 0.0
        %234 = vmatprep.subr.mxu0 0.0
        %235 = vmatpush1.msra.mxu0 0.0
        %236 = vmatprep.subr.mxu0 0.0
        %237 = vmatpush1.msra.mxu0 0.0
        %238 = vmatprep.subr.mxu0 0.0
        %239 = vmatpush1.msra.mxu0 0.0
        %240 = vmatprep.subr.mxu0 0.0
        %241 = vmatpush1.msra.mxu0 0.0
        %242 = vmatprep.subr.mxu0 0.0
        %243 = vmatpush1.msra.mxu0 0.0
        %244 = vmatprep.subr.mxu0 0.0
        %245 = vmatpush1.msra.mxu0 0.0
        %246 = vmatprep.subr.mxu0 0.0
        %247 = vmatpush1.msra.mxu0 0.0
        %248 = vmatprep.subr.mxu0 0.0
        %249 = vmatpush1.msra.mxu0 0.0
        %250 = vmatprep.subr.mxu0 0.0
        %251 = vmatpush1.msra.mxu0 0.0
        %252 = vmatprep.subr.mxu0 0.0
        %253 = vmatpush1.msra.mxu0 0.0
        %254 = vmatprep.subr.mxu0 0.0
        %255 = vmatpush1.msra.mxu0 0.0
        %256 = vmatprep.subr.mxu0 0.0
        %257 = vmatpush1.msra.mxu0 0.0
        %258 = vmatprep.mubr.f32.mxu0 0.0
        %259 = vmatmul.mubr.f32.gmra.mrb[0].mxu0 %v182
        %v260 = vpop.f32.mrb[0].mxu0
        %v261 = vadd.f32 0.0, %v260
        %v262 = vpop.f32.mrb[0].mxu0
        %v263 = vadd.f32 0.0, %v262
        %264 = vdwg.mxu0
        %265 = vmatprep.subr.mxu0 0.0
        %266 = vmatpush1.msra.mxu0 %v170
        %267 = vmatprep.subr.mxu0 0.0
        %268 = vmatpush1.msra.mxu0 %v173
        %269 = vmatprep.subr.mxu0 0.0
        %270 = vmatpush1.msra.mxu0 %v176
        %271 = vmatprep.subr.mxu0 0.0
        %272 = vmatpush1.msra.mxu0 %v192
        %273 = vmatprep.subr.mxu0 0.0
        %274 = vmatpush1.msra.mxu0 0.0
        %275 = vmatprep.subr.mxu0 0.0
        %276 = vmatpush1.msra.mxu0 0.0
        %277 = vmatprep.subr.mxu0 0.0
        %278 = vmatpush1.msra.mxu0 0.0
        %279 = vmatprep.subr.mxu0 0.0
        %280 = vmatpush1.msra.mxu0 0.0
        %281 = vmatprep.subr.mxu0 0.0
        %282 = vmatpush1.msra.mxu0 0.0
        %283 = vmatprep.subr.mxu0 0.0
        %284 = vmatpush1.msra.mxu0 0.0
        %285 = vmatprep.subr.mxu0 0.0
        %286 = vmatpush1.msra.mxu0 0.0
        %287 = vmatprep.subr.mxu0 0.0
        %288 = vmatpush1.msra.mxu0 0.0
        %289 = vmatprep.subr.mxu0 0.0
        %290 = vmatpush1.msra.mxu0 0.0
        %291 = vmatprep.subr.mxu0 0.0
        %292 = vmatpush1.msra.mxu0 0.0
        %293 = vmatprep.subr.mxu0 0.0
        %294 = vmatpush1.msra.mxu0 0.0
        %295 = vmatprep.subr.mxu0 0.0
        %296 = vmatpush1.msra.mxu0 0.0
        %297 = vmatprep.subr.mxu0 0.0
        %298 = vmatpush1.msra.mxu0 0.0
        %299 = vmatprep.subr.mxu0 0.0
        %300 = vmatpush1.msra.mxu0 0.0
        %301 = vmatprep.subr.mxu0 0.0
        %302 = vmatpush1.msra.mxu0 0.0
        %303 = vmatprep.subr.mxu0 0.0
        %304 = vmatpush1.msra.mxu0 0.0
        %305 = vmatprep.subr.mxu0 0.0
        %306 = vmatpush1.msra.mxu0 0.0
        %307 = vmatprep.subr.mxu0 0.0
        %308 = vmatpush1.msra.mxu0 0.0
        %309 = vmatprep.subr.mxu0 0.0
        %310 = vmatpush1.msra.mxu0 0.0
        %311 = vmatprep.subr.mxu0 0.0
        %312 = vmatpush1.msra.mxu0 0.0
        %313 = vmatprep.subr.mxu0 0.0
        %314 = vmatpush1.msra.mxu0 0.0
        %315 = vmatprep.subr.mxu0 0.0
        %316 = vmatpush1.msra.mxu0 0.0
        %317 = vmatprep.subr.mxu0 0.0
        %318 = vmatpush1.msra.mxu0 0.0
        %319 = vmatprep.subr.mxu0 0.0
        %320 = vmatpush1.msra.mxu0 0.0
        %321 = vmatprep.subr.mxu0 0.0
        %322 = vmatpush1.msra.mxu0 0.0
        %323 = vmatprep.subr.mxu0 0.0
        %324 = vmatpush1.msra.mxu0 0.0
        %325 = vmatprep.subr.mxu0 0.0
        %326 = vmatpush1.msra.mxu0 0.0
        %327 = vmatprep.subr.mxu0 0.0
        %328 = vmatpush1.msra.mxu0 0.0
        %329 = vmatprep.mubr.f32.mxu0 0.0
        %330 = vmatmul.mubr.f32.gmra.mrb[0].mxu0 %v182
        %v331 = vpop.f32.mrb[0].mxu0
        %v332 = vadd.f32 0.0, %v331
        %v333 = vpop.f32.mrb[0].mxu0
        %334 = vdwg.mxu0
        %v335 = vpack.c.bf16 %v261, %v261
        %v336 = vpack.c.bf16 %v263, %v263
        %v337 = vld [vmem:[%s2] sm:$0xff]
        %338 = vmatprep.subr.bf16.mxu0 0
        %339 = vmatpush1.bf16.xpose.msra.mxu0 %v336
        %340 = vmatprep.subr.bf16.mxu0 0
        %341 = vmatpush1.bf16.xpose.msra.mxu0 0
        %342 = vmatprep.subr.bf16.mxu0 0
        %343 = vmatpush1.bf16.xpose.msra.mxu0 0
        %344 = vmatprep.subr.bf16.mxu0 0
        %345 = vmatpush1.bf16.xpose.msra.mxu0 0
        %346 = vmatprep.subr.bf16.mxu0 0
        %347 = vmatpush1.bf16.xpose.msra.mxu0 0
        %348 = vmatprep.subr.bf16.mxu0 0
        %349 = vmatpush1.bf16.xpose.msra.mxu0 0
        %350 = vmatprep.subr.bf16.mxu0 0
        %351 = vmatpush1.bf16.xpose.msra.mxu0 0
        %352 = vmatprep.subr.bf16.mxu0 0
        %353 = vmatpush1.bf16.xpose.msra.mxu0 0
        %354 = vmatprep.subr.bf16.mxu0 0
        %355 = vmatpush1.bf16.xpose.msra.mxu0 0
        %356 = vmatprep.subr.bf16.mxu0 0
        %357 = vmatpush1.bf16.xpose.msra.mxu0 0
        %358 = vmatprep.subr.bf16.mxu0 0
        %359 = vmatpush1.bf16.xpose.msra.mxu0 0
        %360 = vmatprep.subr.bf16.mxu0 0
        %361 = vmatpush1.bf16.xpose.msra.mxu0 0
        %362 = vmatprep.subr.bf16.mxu0 0
        %363 = vmatpush1.bf16.xpose.msra.mxu0 0
        %364 = vmatprep.subr.bf16.mxu0 0
        %365 = vmatpush1.bf16.xpose.msra.mxu0 0
        %366 = vmatprep.subr.bf16.mxu0 0
        %367 = vmatpush1.bf16.xpose.msra.mxu0 0
        %368 = vmatprep.subr.bf16.mxu0 0
        %369 = vmatpush1.bf16.xpose.msra.mxu0 0
        %370 = vmatprep.mubr.bf16.mxu0 0
        %371 = vmatmul.mubr.bf16.gmra.mrb[0].mxu0 %v335
        %v372 = vpop.f32.mrb[0].mxu0
        %v373 = vadd.f32 %v337, %v372
        %v374 = vpop.f32.mrb[0].mxu0
        %v375 = vpop.f32.mrb[0].mxu0
        %v376 = vpop.f32.mrb[0].mxu0
        %377 = vdwg.mxu0
        %vm378 = vcmask 64512
        %v379 = vsel %vm378, %v373, -inf
        %380 = vmax.xlane.f32.xlu0 %v379
        %v381 = vpop.xlane.xlu0 %380
        %v382 = vsub.f32 %v373, %v381
        %v383 = vmul.f32 %v382, 1.442695
        %v384 = vpow.pop %v383
        %v385 = vsel %vm378, %v384, 0.0
        %386 = vadd.xlane.f32.xlu0 %v385
        %v387 = vpop.xlane.xlu0 %386
        %v388 = vrcp.pop %v387
        %v389 = vmul.f32 %v384, %v388
        %v390 = vpack.c.bf16 %v389, %v389
        %v391 = vpack.c.bf16 %v332, %v332
        %v393 = vsel %vm378, %v390, 0
        %vm395 = vcmask 1043456
        %v397 = vsel %vm395, %v391, 0
        %399 = vmatprep.subr.bf16.mxu0 0
        %400 = vmatpush1.bf16.msra.mxu0 %v397
        %401 = vmatprep.subr.bf16.mxu0 0
        %402 = vmatpush1.bf16.msra.mxu0 0
        %403 = vmatprep.subr.bf16.mxu0 0
        %404 = vmatpush1.bf16.msra.mxu0 0
        %405 = vmatprep.subr.bf16.mxu0 0
        %406 = vmatpush1.bf16.msra.mxu0 0
        %407 = vmatprep.subr.bf16.mxu0 0
        %408 = vmatpush1.bf16.msra.mxu0 0
        %409 = vmatprep.subr.bf16.mxu0 0
        %410 = vmatpush1.bf16.msra.mxu0 0
        %411 = vmatprep.subr.bf16.mxu0 0
        %412 = vmatpush1.bf16.msra.mxu0 0
        %413 = vmatprep.subr.bf16.mxu0 0
        %414 = vmatpush1.bf16.msra.mxu0 0
        %415 = vmatprep.subr.bf16.mxu0 0
        %416 = vmatpush1.bf16.msra.mxu0 0
        %417 = vmatprep.subr.bf16.mxu0 0
        %418 = vmatpush1.bf16.msra.mxu0 0
        %419 = vmatprep.subr.bf16.mxu0 0
        %420 = vmatpush1.bf16.msra.mxu0 0
        %421 = vmatprep.subr.bf16.mxu0 0
        %422 = vmatpush1.bf16.msra.mxu0 0
        %423 = vmatprep.subr.bf16.mxu0 0
        %424 = vmatpush1.bf16.msra.mxu0 0
        %425 = vmatprep.subr.bf16.mxu0 0
        %426 = vmatpush1.bf16.msra.mxu0 0
        %427 = vmatprep.subr.bf16.mxu0 0
        %428 = vmatpush1.bf16.msra.mxu0 0
        %429 = vmatprep.subr.bf16.mxu0 0
        %430 = vmatpush1.bf16.msra.mxu0 0
        %431 = vmatprep.mubr.bf16.mxu0 0
        %432 = vmatmul.mubr.bf16.gmra.mrb[0].mxu0 %v393
        %v433 = vpop.f32.mrb[0].mxu0
        %v434 = vadd.f32 0.0, %v433
        %v435 = vpop.f32.mrb[0].mxu0
        %v436 = vpop.f32.mrb[0].mxu0
        %v437 = vpop.f32.mrb[0].mxu0
        %438 = vdwg.mxu0
        %439 = vst [vmem:[%s161] sm:$0xff] %v434
        %s440 = sand.u32 %s93, 1
        %s441 = scalar_lea.sflag [#allocation3], %s440
        %s442 = sand.u32 %s93, 1
        %s443 = smul.addr %s442, 8
        %s444 = scalar_lea.vmem [#allocation2], %s443
        // Predicated region
        $region33: #{head_attention.1} parent=31 // pred_check
          %p445 = pneg %p103
        $region34: #{head_attention.1} parent=31 // pred_check_branch
          %447 = sbr.rel (%p445) target = $region36
        $region35: #{head_attention.1} parent=31 // pred_region
          %s449 = ssub.s32 128, 128
          %450 = vsyncadd %s441, %s449
          %s451 = smul.addr %s17, 128
          %s452 = scalar_lea.hbm %s3, %s451
          %s454 = sshll.u32 %s444, 4
          %s455 = int_to_ptr.vmem [resolvable:$true] %s454
          %457 = dma.vmem_to_hbm [thread:$0]  %s455, 128, %s452, %s441
        $region36: #{head_attention.1} parent=31 // pred_fallthru
          _
      $region32: #{head_attention.1} parent=5 // pred_fallthru
        _
      %p458 = scmp.le.s32.totalorder 2, %s12
      // Predicated region
      $region37: #{head_attention.1} parent=5 // pred_check
        %p459 = pneg %p458
      $region38: #{head_attention.1} parent=5 // pred_check_branch
        %461 = sbr.rel (%p459) target = $region40
      $region39: #{head_attention.1} parent=5 // pred_region
        %s462 = ssub.s32 %s12, 2
        // Predicated region
        $region41: #{head_attention.1} parent=39 // pred_check
          %p463 = pneg %p109
        $region42: #{head_attention.1} parent=39 // pred_check_branch
          %465 = sbr.rel (%p463) target = $region44
        $region43: #{head_attention.1} parent=39 // pred_region
          %s466 = sand.u32 %s94, 1
          %s467 = scalar_lea.sflag [#allocation3], %s466
          %s468 = sand.u32 %s94, 1
          %s469 = smul.addr %s468, 8
          %s470 = scalar_lea.vmem [#allocation2], %s469
          %471 = dma.done %s467, 128
        $region44: #{head_attention.1} parent=39 // pred_fallthru
          _
      $region40: #{head_attention.1} parent=5 // pred_fallthru
        _
    $region6: #{head_attention.1} parent=1 // loop_footer
      %s16 = sadd.s32 1, %s12
    $region7: #{head_attention.1} parent=1 // loop_footer_branch
      %11 = sbr.rel target = $region3
    $region8: #{head_attention.1} parent=1 // loop_exit
      _
    %472 = vsyncpa [#allocation3], 1
    %s473 = scalar_lea.sflag [#allocation3], 1
    %474 = vsyncpa %s473, 1

</llo_original>
